<compile_context>
chip_gen: v5e
topology: v5e:2x2
jax: 0.10.0
libtpu: 0.0.40
codegen_flags: <defaults>
</compile_context>

<pallas_src>
import jax
import jax.numpy as jnp
from jax.experimental import pallas as pl
from jax.experimental.pallas import tpu as pltpu

LANE = 128
_MAX_BLOCK_BYTES = 4 * 1024 * 1024  # <=4 MiB/buffer -> <=16 MiB with 2x(in+out) buffers


def _copy_kernel(x_ref, o_ref):
    # Straight VMEM tile copy: the entire "compute" of a view/reshape.
    o_ref[...] = x_ref[...]


def _resolve_shape(shape, numel):
    """Resolve a torch-style view shape (may contain a single -1)."""
    if len(shape) == 1 and isinstance(shape[0], (tuple, list)):
        shape = tuple(shape[0])
    shape = tuple(int(s) for s in shape)
    if shape.count(-1) > 1:
        raise ValueError("only one -1 allowed in view shape")
    if -1 in shape:
        known = 1
        for s in shape:
            if s != -1:
                known *= s
        if known == 0 or numel % known != 0:
            raise ValueError(f"cannot view {numel} elements as {shape}")
        shape = tuple(numel // known if s == -1 else s for s in shape)
    prod = 1
    for s in shape:
        prod *= s
    if prod != numel:
        raise ValueError(f"shape {shape} is invalid for input of size {numel}")
    return shape


def _sublanes(dtype):
    # 8 sublanes for 32-bit, 16 for 16-bit, 32 for 8-bit (packed tiles).
    return max(8, 32 // jnp.dtype(dtype).itemsize)


def _pallas_copy_reshape(x, out_shape):
    """Copy `x` (row-major contiguous) through a Pallas kernel and reinterpret
    as `out_shape`.  Returns None when no padding-free lane-dense tiling
    exists; the caller then falls back to the metadata-only jnp.reshape."""
    numel = int(x.size)
    if numel == 0 or numel % LANE != 0:
        return None
    itemsize = jnp.dtype(x.dtype).itemsize
    sub = _sublanes(x.dtype)

    # Prefer a wide lane axis whose row count tiles into dtype-aware sublane
    # multiples: unmasked wide vst, no padding, no post-kernel slice.
    cols = rows = None
    for c in (1024, 512, 256, 128):
        if numel % c == 0 and (numel // c) % sub == 0:
            cols, rows = c, numel // c
            break

    if cols is None:
        # Small leftover case: a single full-array block is always legal.
        if numel * itemsize > _MAX_BLOCK_BYTES:
            return None
        for c in (1024, 512, 256, 128):
            if numel % c == 0:
                cols, rows = c, numel // c
                break
        block_rows = rows
    else:
        # Largest block (multiple of `sub` rows) that divides `rows` and
        # keeps each buffer under the per-generation-safe byte cap.
        max_block_rows = max(sub, (_MAX_BLOCK_BYTES // (cols * itemsize)) // sub * sub)
        block_rows = sub
        br = min(rows, max_block_rows)
        br -= br % sub
        while br >= sub:
            if rows % br == 0:
                block_rows = br
                break
            br -= sub

    slab = x.reshape(rows, cols)          # metadata-only on contiguous input
    grid = (rows // block_rows,)

    copied = pl.pallas_call(
        _copy_kernel,
        out_shape=jax.ShapeDtypeStruct((rows, cols), x.dtype),
        grid_spec=pltpu.PrefetchScalarGridSpec(
            num_scalar_prefetch=0,
            grid=grid,
            in_specs=[pl.BlockSpec((block_rows, cols), lambda i: (i, 0))],
            out_specs=pl.BlockSpec((block_rows, cols), lambda i: (i, 0)),
        ),
        compiler_params=pltpu.CompilerParams(
            dimension_semantics=("parallel",),
        ),
        cost_estimate=pl.CostEstimate(
            flops=0, transcendentals=0, bytes_accessed=2 * numel * itemsize),
    )(slab)

    return copied.reshape(out_shape)      # metadata-only reinterpretation


class View:
    """JAX/Pallas port of the PyTorch `View` nn.Module (forward = .view())."""

    def __init__(self, *shape):
        self.shape = shape

    def __call__(self, x):
        out_shape = _resolve_shape(self.shape, int(x.size))
        y = _pallas_copy_reshape(x, out_shape)
        if y is None:
            # torch .view() on a contiguous tensor is metadata-only; reshape
            # is the exact zero-copy semantic equivalent.
            # TODO(synk): torch raises on non-contiguous .view(); JAX arrays
            # are always logically contiguous, so that error path is moot here.
            return jnp.reshape(x, out_shape)
        return y


if __name__ == "__main__":
    key = jax.random.PRNGKey(0)
    x = jax.random.normal(key, (2, 4, 16, 16), dtype=jnp.float32)

    # View NCHW (2, 4, 16, 16) as (2, 4, 256) == torch x.view(2, 4, 256).
    view = View(2, 4, 256)
    y = jax.block_until_ready(view(x))

    ref = jnp.reshape(x, (2, 4, 256))
    assert y.shape == (2, 4, 256)
    assert y.dtype == x.dtype
    assert bool(jnp.all(y == ref))

    # Also exercise the -1 path, like x.view(2, -1).
    y2 = jax.block_until_ready(View(2, -1)(x))
    assert y2.shape == (2, 4 * 16 * 16)
    assert bool(jnp.all(y2 == jnp.reshape(x, (2, -1))))

    # bf16 path (dtype-aware sublane tiling) and a non-128-multiple fallback.
    xb = jax.random.normal(key, (2, 4, 16, 16), dtype=jnp.bfloat16)
    y3 = jax.block_until_ready(View(8, -1)(xb))
    assert y3.shape == (8, 256) and bool(jnp.all(y3 == jnp.reshape(xb, (8, 256))))

    xs = jax.random.normal(key, (3, 5, 7), dtype=jnp.float32)  # 105 elems -> reshape fallback
    y4 = jax.block_until_ready(View(-1,)(xs))
    assert y4.shape == (105,) and bool(jnp.all(y4 == jnp.reshape(xs, (105,))))

    print("KERNEL_OK")
</pallas_src>

<mosaic_0001>
module attributes {stable_mosaic.version = 11 : i64} {
  func.func @_copy_kernel(%arg0: i32, %arg1: memref<8x256xf32, #tpu.memory_space<vmem>>, %arg2: memref<8x256xf32, #tpu.memory_space<vmem>>) attributes {dimension_semantics = [#tpu.dimension_semantics<parallel>], iteration_bounds = array<i64: 1>, scalar_prefetch = 0 : i64, scratch_operands = 0 : i64, tpu.core_type = #tpu.core_type<tc>, window_params = [{transform_indices = @transform_0, window_bounds = array<i64: 8, 256>}, {transform_indices = @transform_1, window_bounds = array<i64: 8, 256>}]} {
    %c0 = arith.constant 0 : index
    %c0_0 = arith.constant 0 : index
    %0 = vector.load %arg1[%c0, %c0_0] : memref<8x256xf32, #tpu.memory_space<vmem>>, vector<8x256xf32>
    %c0_1 = arith.constant 0 : index
    %c0_2 = arith.constant 0 : index
    %1 = vector.load %arg2[%c0_1, %c0_2] : memref<8x256xf32, #tpu.memory_space<vmem>>, vector<8x256xf32>
    tpu.vector_store %arg2[%c0_1, %c0_2], %0 {strides = array<i32>} : memref<8x256xf32, #tpu.memory_space<vmem>>, vector<8x256xf32>,
    return
  }
  func.func @transform_0(%arg0: i32) -> (i32, i32) {
    %c0_i32 = arith.constant 0 : i32
    %c0_i32_0 = arith.constant 0 : i32
    return %arg0, %c0_i32 : i32, i32
  }
  func.func @transform_1(%arg0: i32) -> (i32, i32) {
    %c0_i32 = arith.constant 0 : i32
    %c0_i32_0 = arith.constant 0 : i32
    return %arg0, %c0_i32 : i32, i32
  }
}

</mosaic_0001>

<llo_original>
// kernel: tpu_custom_call.1
$region0: #{tpu_custom_call.1}
  #allocation0 [shape = 'u32[]', space=smem, size = 0x4, offset = 0x4, fixed_abs, tag = 'smem constant byte address 0x4 - core index']
  #allocation1 [shape = 'u32[72,128]{1,0:T(1,128)}', space=vmem, size = 0x9000, scoped, tag = 'internal scratch']
  %s0 = inlined_call_operand.hbm [shape: f32[8,256], index: 0, kind: input, shape index: {}]
  %s1 = inlined_call_operand.hbm [shape: f32[8,256], index: 1, kind: output, shape index: {}]
  %s2 = sld [smem:[#allocation0]]
  $region18: #{tpu_custom_call.1} parent=0
    _
  %s4 = ssub.s32 1, %s2
  %s5 = scalar_select 0, %s4, %s2
  $region1: #{tpu_custom_call.1} parent=0
    #allocation2 [shape = 'u8[8192]{0}', space=vmem, size = 0x2000, scoped, tag = 'input window, operand 0, single buffered']
    #allocation3 [shape = 's32[1]{0}', space=sflag, size = 0x4, scoped, tag = 'scoped memory for tpu_custom_call.1']
    #allocation4 [shape = 's32[1]{0}', space=sflag, size = 0x4, scoped, tag = 'scoped memory for tpu_custom_call.1']
    #allocation5 [shape = 'u8[8192]{0}', space=vmem, size = 0x2000, scoped, tag = 'output window, operand 0, single buffered']
    %6 = vsyncpa [#allocation3], 0
    %7 = vsyncpa [#allocation4], 0
    // Predicated region
    $region2: #{tpu_custom_call.1} parent=1 // pred_check
      _
    $region3: #{tpu_custom_call.1} parent=1 // pred_check_branch
      %9 = sbr.rel (0) target = $region5
    $region4: #{tpu_custom_call.1} parent=1 // pred_region
      %11 = vsyncadd [#allocation3], 0
      %s13 = sshll.u32 %s0, 4
      %s14 = int_to_ptr.hbm [resolvable:$true] %s13
      %s15 = sshll.u32 [#allocation2], 4
      %s16 = int_to_ptr.vmem [resolvable:$true] %s15
      %18 = dma.hbm_to_vmem [thread:$0]  %s14, 256, %s16, [#allocation3]
    $region5: #{tpu_custom_call.1} parent=1 // pred_fallthru
      _
    // Predicated region
    $region6: #{tpu_custom_call.1} parent=1 // pred_check
      _
    $region7: #{tpu_custom_call.1} parent=1 // pred_check_branch
      %20 = sbr.rel (0) target = $region9
    $region8: #{tpu_custom_call.1} parent=1 // pred_region
      %22 = dma.done [#allocation3], 256
    $region9: #{tpu_custom_call.1} parent=1 // pred_fallthru
      _
    %v23 = vld [vmem:[#allocation2] sm:$0xff]
    %v24 = vld [vmem:[#allocation2 + $0x8] sm:$0xff]
    %25 = vst [vmem:[#allocation5] sm:$0xff] %v23
    %26 = vst [vmem:[#allocation5 + $0x8] sm:$0xff] %v24
    // Predicated region
    $region10: #{tpu_custom_call.1} parent=1 // pred_check
      _
    $region11: #{tpu_custom_call.1} parent=1 // pred_check_branch
      %28 = sbr.rel (0) target = $region13
    $region12: #{tpu_custom_call.1} parent=1 // pred_region
      %30 = vsyncadd [#allocation4], 0
      %s32 = sshll.u32 [#allocation5], 4
      %s33 = int_to_ptr.vmem [resolvable:$true] %s32
      %s34 = sshll.u32 %s1, 4
      %s35 = int_to_ptr.hbm [resolvable:$true] %s34
      %37 = dma.vmem_to_hbm [thread:$0]  %s33, 256, %s35, [#allocation4]
    $region13: #{tpu_custom_call.1} parent=1 // pred_fallthru
      _
    // Predicated region
    $region14: #{tpu_custom_call.1} parent=1 // pred_check
      _
    $region15: #{tpu_custom_call.1} parent=1 // pred_check_branch
      %39 = sbr.rel (0) target = $region17
    $region16: #{tpu_custom_call.1} parent=1 // pred_region
      %41 = dma.done [#allocation4], 256
    $region17: #{tpu_custom_call.1} parent=1 // pred_fallthru
      _
    %42 = vsyncpa [#allocation3], 1
    %43 = vsyncpa [#allocation4], 1

</llo_original>
